<compile_context>
chip_gen: v7x
topology: tpu7x:2x2x1
jax: 0.10.0
libtpu: 0.0.40
codegen_flags: <defaults>
</compile_context>

<pallas_src>
import math
from functools import partial

import jax
import jax.numpy as jnp
from jax.experimental import pallas as pl
from jax.experimental.pallas import tpu as pltpu


def _round_up(x, m):
    return ((x + m - 1) // m) * m


def _ffn_kernel(x_ref, w_ref, b_ref, o_ref):
    # x_ref: (TM, K), w_ref: (K, TN), b_ref: (1, TN), o_ref: (TM, TN)
    y = jnp.dot(x_ref[...], w_ref[...], preferred_element_type=jnp.float32)
    y = y + b_ref[...]                       # bias broadcast over rows (f32)
    o_ref[...] = jnp.maximum(y, 0.0).astype(o_ref.dtype)


def _tpu_vmem_capacity_bytes():
    try:
        return int(pltpu.get_tpu_info().vmem_capacity_bytes)
    except Exception:
        return 64 << 20          # conservative fallback: v7x per-TC VMEM


def _vmem_budget_and_limit():
    cap = _tpu_vmem_capacity_bytes()
    # ~40 MiB of scratch on v7x (64 MiB VMEM), ~100 MiB on v5e/v6e (128 MiB).
    budget = max(16 << 20, min(100 << 20, cap - (24 << 20)))
    limit = min(cap - (8 << 20), budget + (8 << 20))
    return budget, int(limit)


def _pick_tn(hidden):
    # Full-dim block when small (always legal); otherwise a multiple of 256
    # so the 2x256x256 MXU (v6e/v7x) is fully occupied.  A partial last tile
    # is handled by Pallas' implicit edge masking — no wrapper padding.
    if hidden <= 512:
        return hidden
    return 512


def _pick_tm(m, d_in, tn, itemsize, budget):
    """Largest TM (multiple of 8) whose DOUBLE-BUFFERED tiles (x, w, b, out)
    fit the VMEM budget, capped at 512 rows and additionally sized so the M
    axis contributes >= ~8 grid steps (pipeline overlap + megacore)."""
    kp = _round_up(d_in, 128)        # x lane padding (physical)
    knr = _round_up(d_in, 8)         # w sublane padding (physical)
    tnp = _round_up(tn, 128)         # lane padding of the N tile (physical)
    # Weight + bias tiles stream over the N grid axis -> 2 buffers each.
    fixed = 2 * (knr * tnp + 8 * tnp) * itemsize
    avail = max(budget - fixed, 1 << 20)
    per_row = 2 * (kp + tnp) * itemsize      # x-in + out tiles, double-buffered
    tm = (avail // per_row) // 8 * 8
    tm = max(8, min(int(tm), 512))
    tm = min(tm, max(8, _round_up(pl.cdiv(m, 8), 8)))   # >= ~8 M-steps
    return int(tm)


@partial(jax.jit, static_argnames=("force_pallas", "use_bf16_matmul"))
def positionwise_feed_forward(x, w, b, *, force_pallas=False,
                              use_bf16_matmul=False):
    """relu(x @ w + b).  x: (..., d_in), w: (d_in, hidden), b: (hidden,)."""
    *lead, d_in = x.shape
    hidden = w.shape[1]
    m = math.prod(lead) if lead else 1
    itemsize = jnp.dtype(x.dtype).itemsize
    out_dtype = x.dtype

    # Tiny-problem fallback: fused XLA matmul+bias+relu beats kernel launch
    # overhead + padded-lane MXU work below a few MFLOP.
    if not force_pallas and (2 * m * d_in * hidden) < (1 << 22):
        y = jnp.maximum(jnp.dot(x.reshape(m, d_in), w) + b, 0.0)
        return y.reshape(*lead, hidden).astype(out_dtype)

    x2 = x.reshape(m, d_in)
    b2 = b.astype(jnp.float32).reshape(1, hidden)   # bias added in f32 post-dot

    if use_bf16_matmul:
        # Native-rate MXU on v6e/v7x; accumulation stays f32 in-kernel.
        x2 = x2.astype(jnp.bfloat16)
        w = w.astype(jnp.bfloat16)
        itemsize = 2

    budget, vmem_limit = _vmem_budget_and_limit()
    tn = _pick_tn(hidden)
    tm = _pick_tm(m, d_in, tn, itemsize, budget)

    grid = (pl.cdiv(m, tm), pl.cdiv(hidden, tn))

    cost = pl.CostEstimate(
        flops=2 * m * d_in * hidden,
        transcendentals=0,
        bytes_accessed=(m * d_in + d_in * hidden + hidden) * itemsize
        + m * hidden * jnp.dtype(out_dtype).itemsize,
    )

    out = pl.pallas_call(
        _ffn_kernel,
        out_shape=jax.ShapeDtypeStruct((m, hidden), out_dtype),
        grid_spec=pltpu.PrefetchScalarGridSpec(
            num_scalar_prefetch=0,
            grid=grid,
            in_specs=[
                # x row tile: index constant across j -> DMA'd once per i.
                pl.BlockSpec((tm, d_in), lambda i, j: (i, 0)),
                # weight / bias column tiles stream along j (double-buffered).
                pl.BlockSpec((d_in, tn), lambda i, j: (0, j)),
                pl.BlockSpec((1, tn), lambda i, j: (0, j)),
            ],
            out_specs=pl.BlockSpec((tm, tn), lambda i, j: (i, j)),
        ),
        compiler_params=pltpu.CompilerParams(
            dimension_semantics=("parallel", "parallel"),
            vmem_limit_bytes=vmem_limit,
        ),
        cost_estimate=cost,
    )(x2, w, b2)

    return out.reshape(*lead, hidden)


if __name__ == "__main__":
    # Small shapes implied by the forward: x (batch, seq, number_of_inputs).
    batch, seq, number_of_inputs, hidden = 2, 8, 32, 64

    key = jax.random.PRNGKey(0)
    kx, kw, kb = jax.random.split(key, 3)

    x = jax.random.normal(kx, (batch, seq, number_of_inputs), dtype=jnp.float32)

    # Deterministic init mimicking nn.Linear's uniform(-1/sqrt(fan_in), ...).
    bound = 1.0 / math.sqrt(number_of_inputs)
    # PyTorch stores W as (hidden, d_in); we keep it pre-transposed (d_in, hidden).
    w = jax.random.uniform(kw, (number_of_inputs, hidden),
                           minval=-bound, maxval=bound, dtype=jnp.float32)
    b = jax.random.uniform(kb, (hidden,),
                           minval=-bound, maxval=bound, dtype=jnp.float32)

    # Force the Pallas path so the kernel itself is exercised at demo size.
    out = positionwise_feed_forward(x, w, b, force_pallas=True)
    out = jax.block_until_ready(out)

    # Pure-JAX reference check.
    ref = jnp.maximum(jnp.einsum("bsd,dh->bsh", x, w) + b, 0.0)
    assert out.shape == (batch, seq, hidden)
    assert jnp.allclose(out, ref, atol=1e-5, rtol=1e-5)

    print("KERNEL_OK")
</pallas_src>

<mosaic_0001>
module attributes {stable_mosaic.version = 11 : i64} {
  func.func @_ffn_kernel(%arg0: i32, %arg1: i32, %arg2: memref<8x32xf32, #tpu.memory_space<vmem>>, %arg3: memref<32x64xf32, #tpu.memory_space<vmem>>, %arg4: memref<1x64xf32, #tpu.memory_space<vmem>>, %arg5: memref<8x64xf32, #tpu.memory_space<vmem>>) attributes {dimension_semantics = [#tpu.dimension_semantics<parallel>, #tpu.dimension_semantics<parallel>], iteration_bounds = array<i64: 2, 1>, scalar_prefetch = 0 : i64, scratch_operands = 0 : i64, tpu.core_type = #tpu.core_type<tc>, window_params = [{transform_indices = @transform_0, window_bounds = array<i64: 8, 32>}, {transform_indices = @transform_1, window_bounds = array<i64: 32, 64>}, {transform_indices = @transform_2, window_bounds = array<i64: 1, 64>}, {transform_indices = @transform_3, window_bounds = array<i64: 8, 64>}]} {
    %c0 = arith.constant 0 : index
    %c0_0 = arith.constant 0 : index
    %0 = vector.load %arg2[%c0, %c0_0] : memref<8x32xf32, #tpu.memory_space<vmem>>, vector<8x32xf32>
    %c0_1 = arith.constant 0 : index
    %c0_2 = arith.constant 0 : index
    %1 = vector.load %arg3[%c0_1, %c0_2] : memref<32x64xf32, #tpu.memory_space<vmem>>, vector<32x64xf32>
    %cst = arith.constant dense<0.000000e+00> : vector<8x64xf32>
    %2 = tpu.matmul %0, %1, %cst {dimension_numbers = #tpu.dot_dimension_numbers<[1], [0], [0], [1], [0, 0, 1, 1], [], []>} : vector<8x32xf32>, vector<32x64xf32>, vector<8x64xf32> -> vector<8x64xf32>
    %c0_3 = arith.constant 0 : index
    %c0_4 = arith.constant 0 : index
    %3 = vector.load %arg4[%c0_3, %c0_4] : memref<1x64xf32, #tpu.memory_space<vmem>>, vector<1x64xf32>
    %4 = vector.broadcast %3 : vector<1x64xf32> to vector<8x64xf32>
    %5 = arith.addf %2, %4 : vector<8x64xf32>
    %cst_5 = arith.constant 0.000000e+00 : f32
    %6 = vector.broadcast %cst_5 : f32 to vector<8x64xf32>
    %7 = arith.maximumf %5, %6 : vector<8x64xf32>
    %c0_6 = arith.constant 0 : index
    %c0_7 = arith.constant 0 : index
    %8 = vector.load %arg5[%c0_6, %c0_7] : memref<8x64xf32, #tpu.memory_space<vmem>>, vector<8x64xf32>
    tpu.vector_store %arg5[%c0_6, %c0_7], %7 {strides = array<i32>} : memref<8x64xf32, #tpu.memory_space<vmem>>, vector<8x64xf32>,
    return
  }
  func.func @transform_0(%arg0: i32, %arg1: i32) -> (i32, i32) {
    %c0_i32 = arith.constant 0 : i32
    %c0_i32_0 = arith.constant 0 : i32
    return %arg0, %c0_i32 : i32, i32
  }
  func.func @transform_1(%arg0: i32, %arg1: i32) -> (i32, i32) {
    %c0_i32 = arith.constant 0 : i32
    %c0_i32_0 = arith.constant 0 : i32
    return %c0_i32, %arg1 : i32, i32
  }
  func.func @transform_2(%arg0: i32, %arg1: i32) -> (i32, i32) {
    %c0_i32 = arith.constant 0 : i32
    %c0_i32_0 = arith.constant 0 : i32
    return %c0_i32, %arg1 : i32, i32
  }
  func.func @transform_3(%arg0: i32, %arg1: i32) -> (i32, i32) {
    %c0_i32 = arith.constant 0 : i32
    return %arg0, %arg1 : i32, i32
  }
}

</mosaic_0001>

<llo_original>
// kernel: positionwise_feed_forward.1
$region0: #{positionwise_feed_forward.1}
  #allocation0 [shape = 'u32[]', space=smem, size = 0x4, offset = 0x4, fixed_abs, tag = 'smem constant byte address 0x4 - core index']
  #allocation1 [shape = 'u32[144,128]{1,0:T(1,128)}', space=vmem, size = 0x12000, scoped, tag = 'internal scratch']
  %s0 = inlined_call_operand.hbm [shape: f32[16,32], index: 0, kind: input, shape index: {}]
  %s1 = inlined_call_operand.hbm [shape: f32[32,64], index: 1, kind: input, shape index: {}]
  %s2 = inlined_call_operand.vmem [shape: f32[1,64], index: 2, kind: input, shape index: {}]
  %s3 = inlined_call_operand.hbm [shape: f32[16,64], index: 3, kind: output, shape index: {}]
  %s4 = sld [smem:[#allocation0]]
  $region53: #{positionwise_feed_forward.1} parent=0
    _
  %s6 = ssub.s32 1, %s4
  %s7 = scalar_select 0, %s6, %s4
  $region1: #{positionwise_feed_forward.1} parent=0
    #allocation2 [shape = 'u8[8192]{0}', space=vmem, size = 0x2000, scoped, tag = 'input window, operand 0']
    #allocation3 [shape = 's32[2]{0}', space=sflag, size = 0x8, scoped, tag = 'scoped memory for positionwise_feed_forward.1']
    #allocation4 [shape = 's32[2]{0}', space=sflag, size = 0x8, scoped, tag = 'scoped memory for positionwise_feed_forward.1']
    #allocation5 [shape = 'u8[16384]{0}', space=vmem, size = 0x4000, scoped, tag = 'input window, operand 1, single buffered']
    #allocation6 [shape = 's32[1]{0}', space=sflag, size = 0x4, scoped, tag = 'scoped memory for positionwise_feed_forward.1']
    #allocation7 [shape = 'u8[8192]{0}', space=vmem, size = 0x2000, scoped, tag = 'output window, operand 0']
    %8 = vsyncpa [#allocation3], 0
    %s9 = scalar_lea.sflag [#allocation3], 1
    %10 = vsyncpa %s9, 0
    %11 = vsyncpa [#allocation6], 0
    %12 = vsyncpa [#allocation4], 0
    %s13 = scalar_lea.sflag [#allocation4], 1
    %14 = vsyncpa %s13, 0
    loop: start=0, step=1, limit=4
    $region2: #{positionwise_feed_forward.1} parent=1 // loop_pre_header
      _
    $region3: #{positionwise_feed_forward.1} parent=1 // loop_header
      %s16 = sphi 0, %s20
      %p17 = scmp.ge.s32.totalorder %s16, 4
      %s23 = sphi 0, %s35
      %s24 = sphi 0, %s31
      %s25 = sphi 0, %s23
      %s26 = sphi 0, %s24
      %s27 = sphi 0, %s25
      %s28 = sphi 0, %s26
      %s38 = sphi 0, %s40
      %s41 = sphi 0, %s38
      %s42 = sphi 0, %s41
      %s58 = sphi 0, %s42
      %s64 = sphi 0, %s66
      %s67 = sphi 0, %s64
      %s68 = sphi 0, %s67
      %s84 = sphi 0, %s68
      %s90 = sphi 0, %s92
      %s93 = sphi 0, %s90
      %s94 = sphi 0, %s93
      %s110 = sphi 0, %s94
      %s118 = sphi 0, %s120
      %s121 = sphi 0, %s118
      %s122 = sphi 0, %s121
      %s138 = sphi 0, %s122
    $region4: #{positionwise_feed_forward.1} parent=1 // loop_header_branch
      %19 = sbr.rel (%p17) target = $region8
    $region5: #{positionwise_feed_forward.1} parent=1 // loop_body
      %s21 = ssub.s32 %s16, 1
      %s22 = ssub.s32 %s16, 2
      %s29 = sadd.s32 1, %s24
      %p30 = scmp.ge.s32.totalorder %s29, 1
      %s31 = scalar_select %p30, 0, %s29
      %s32 = sadd.s32 1, %s23
      %s33 = scalar_select %p30, %s32, %s23
      %p34 = scmp.ge.s32.totalorder %s33, 2
      %s35 = scalar_select %p34, 0, %s33
      %s36 = ssub.s32 %s23, %s35
      %p37 = scmp.eq.s32.totalorder %s36, 0
      %s39 = sadd.s32 %s38, 1
      %s40 = scalar_select %p37, %s38, %s39
      %p43 = pneg %p37
      %p44 = scmp.eq.s32.totalorder %s16, 1
      %p45 = por %p43, %p44
      %p46 = scmp.ne.s32.totalorder %s38, %s41
      %p47 = scmp.eq.s32.totalorder %s16, 0
      %p48 = por %p46, %p47
      %p49 = scmp.ne.s32.totalorder %s38, %s41
      %p50 = scmp.eq.s32.totalorder %s21, 1
      %p51 = por %p49, %p50
      %p52 = scmp.ne.s32.totalorder %s41, %s42
      %p53 = scmp.eq.s32.totalorder %s21, 0
      %p54 = por %p52, %p53
      %p55 = scmp.ne.s32.totalorder %s41, %s42
      %p56 = scmp.eq.s32.totalorder %s22, 1
      %p57 = por %p55, %p56
      %p59 = scmp.ne.s32.totalorder %s42, %s58
      %p60 = scmp.eq.s32.totalorder %s22, 0
      %p61 = por %p59, %p60
      %s62 = ssub.s32 %s24, %s31
      %p63 = scmp.eq.s32.totalorder %s62, 0
      %s65 = sadd.s32 %s64, 1
      %s66 = scalar_select %p63, %s64, %s65
      %p69 = pneg %p63
      %p70 = scmp.eq.s32.totalorder %s16, 1
      %p71 = por %p69, %p70
      %p72 = scmp.ne.s32.totalorder %s64, %s67
      %p73 = scmp.eq.s32.totalorder %s16, 0
      %p74 = por %p72, %p73
      %p75 = scmp.ne.s32.totalorder %s64, %s67
      %p76 = scmp.eq.s32.totalorder %s21, 1
      %p77 = por %p75, %p76
      %p78 = scmp.ne.s32.totalorder %s67, %s68
      %p79 = scmp.eq.s32.totalorder %s21, 0
      %p80 = por %p78, %p79
      %p81 = scmp.ne.s32.totalorder %s67, %s68
      %p82 = scmp.eq.s32.totalorder %s22, 1
      %p83 = por %p81, %p82
      %p85 = scmp.ne.s32.totalorder %s68, %s84
      %p86 = scmp.eq.s32.totalorder %s22, 0
      %p87 = por %p85, %p86
      %s88 = ssub.s32 %s24, %s31
      %p89 = scmp.eq.s32.totalorder %s88, 0
      %s91 = sadd.s32 %s90, 1
      %s92 = scalar_select %p89, %s90, %s91
      %p95 = pneg %p89
      %p96 = scmp.eq.s32.totalorder %s16, 1
      %p97 = por %p95, %p96
      %p98 = scmp.ne.s32.totalorder %s90, %s93
      %p99 = scmp.eq.s32.totalorder %s16, 0
      %p100 = por %p98, %p99
      %p101 = scmp.ne.s32.totalorder %s90, %s93
      %p102 = scmp.eq.s32.totalorder %s21, 1
      %p103 = por %p101, %p102
      %p104 = scmp.ne.s32.totalorder %s93, %s94
      %p105 = scmp.eq.s32.totalorder %s21, 0
      %p106 = por %p104, %p105
      %p107 = scmp.ne.s32.totalorder %s93, %s94
      %p108 = scmp.eq.s32.totalorder %s22, 1
      %p109 = por %p107, %p108
      %p111 = scmp.ne.s32.totalorder %s94, %s110
      %p112 = scmp.eq.s32.totalorder %s22, 0
      %p113 = por %p111, %p112
      %s114 = ssub.s32 %s23, %s35
      %s115 = ssub.s32 %s24, %s31
      %s116 = sor.u32 %s114, %s115
      %p117 = scmp.eq.s32.totalorder %s116, 0
      %s119 = sadd.s32 %s118, 1
      %s120 = scalar_select %p117, %s118, %s119
      %p123 = pneg %p117
      %p124 = scmp.eq.s32.totalorder %s16, 1
      %p125 = por %p123, %p124
      %p126 = scmp.ne.s32.totalorder %s118, %s121
      %p127 = scmp.eq.s32.totalorder %s16, 0
      %p128 = por %p126, %p127
      %p129 = scmp.ne.s32.totalorder %s118, %s121
      %p130 = scmp.eq.s32.totalorder %s21, 1
      %p131 = por %p129, %p130
      %p132 = scmp.ne.s32.totalorder %s121, %s122
      %p133 = scmp.eq.s32.totalorder %s21, 0
      %p134 = por %p132, %p133
      %p135 = scmp.ne.s32.totalorder %s121, %s122
      %p136 = scmp.eq.s32.totalorder %s22, 1
      %p137 = por %p135, %p136
      %p139 = scmp.ne.s32.totalorder %s122, %s138
      %p140 = scmp.eq.s32.totalorder %s22, 0
      %p141 = por %p139, %p140
      %p142 = scmp.le.s32.totalorder 1, %s16
      %p143 = scmp.lt.s32.totalorder %s16, 3
      %p144 = pnand %p142, %p143
      %p145 = pneg %p144
      // Predicated region
      $region9: #{positionwise_feed_forward.1} parent=5 // pred_check
        _
      $region10: #{positionwise_feed_forward.1} parent=5 // pred_check_branch
        %147 = sbr.rel (%p144) target = $region12
      $region11: #{positionwise_feed_forward.1} parent=5 // pred_region
        %s148 = ssub.s32 %s16, 1
        // Predicated region
        $region13: #{positionwise_feed_forward.1} parent=11 // pred_check
          %p149 = pneg %p80
        $region14: #{positionwise_feed_forward.1} parent=11 // pred_check_branch
          %151 = sbr.rel (%p149) target = $region16
        $region15: #{positionwise_feed_forward.1} parent=11 // pred_region
          %s153 = ssub.s32 512, 512
          %154 = vsyncadd [#allocation6], %s153
          %s155 = smul.addr %s26, 128
          %s156 = scalar_lea.hbm %s1, %s155
          %s157 = sshll.u32 [#allocation5], 4
          %s158 = int_to_ptr.vmem [resolvable:$true] %s157
          %163 = dma.hbm_to_vmem [thread:$0]  %s156, 512, %s158, [#allocation6], 128, 128, 8
        $region16: #{positionwise_feed_forward.1} parent=11 // pred_fallthru
          _
        // Predicated region
        $region17: #{positionwise_feed_forward.1} parent=11 // pred_check
          %p164 = pneg %p106
        $region18: #{positionwise_feed_forward.1} parent=11 // pred_check_branch
          %166 = sbr.rel (%p164) target = $region20
        $region19: #{positionwise_feed_forward.1} parent=11 // pred_region
          %p167 = scmp.lt.s32.totalorder %s26, 0
          %s168 = scalar_select %p167, %s26, 0
          %s169 = scalar_lea.vmem %s2, %s168
        $region20: #{positionwise_feed_forward.1} parent=11 // pred_fallthru
          _
      $region12: #{positionwise_feed_forward.1} parent=5 // pred_fallthru
        _
      %p170 = scmp.lt.s32.totalorder %s16, 2
      // Predicated region
      $region21: #{positionwise_feed_forward.1} parent=5 // pred_check
        %p171 = pneg %p170
      $region22: #{positionwise_feed_forward.1} parent=5 // pred_check_branch
        %173 = sbr.rel (%p171) target = $region24
      $region23: #{positionwise_feed_forward.1} parent=5 // pred_region
        // Predicated region
        $region25: #{positionwise_feed_forward.1} parent=23 // pred_check
          %p174 = pneg %p48
        $region26: #{positionwise_feed_forward.1} parent=23 // pred_check_branch
          %176 = sbr.rel (%p174) target = $region28
        $region27: #{positionwise_feed_forward.1} parent=23 // pred_region
          %s177 = sand.u32 %s38, 1
          %s178 = scalar_lea.sflag [#allocation3], %s177
          %s179 = sand.u32 %s38, 1
          %s180 = smul.addr %s179, 8
          %s181 = scalar_lea.vmem [#allocation2], %s180
          %s183 = ssub.s32 128, 128
          %184 = vsyncadd %s178, %s183
          %s185 = smul.addr %s23, 128
          %s186 = scalar_lea.hbm %s0, %s185
          %s188 = sshll.u32 %s181, 4
          %s189 = int_to_ptr.vmem [resolvable:$true] %s188
          %191 = dma.hbm_to_vmem [thread:$0]  %s186, 128, %s189, %s178
        $region28: #{positionwise_feed_forward.1} parent=23 // pred_fallthru
          _
      $region24: #{positionwise_feed_forward.1} parent=5 // pred_fallthru
        _
      %p192 = scmp.le.s32.totalorder 1, %s16
      %p193 = scmp.lt.s32.totalorder %s16, 3
      %p194 = pnand %p192, %p193
      %p195 = pneg %p194
      // Predicated region
      $region29: #{positionwise_feed_forward.1} parent=5 // pred_check
        _
      $region30: #{positionwise_feed_forward.1} parent=5 // pred_check_branch
        %197 = sbr.rel (%p194) target = $region32
      $region31: #{positionwise_feed_forward.1} parent=5 // pred_region
        %s198 = ssub.s32 %s16, 1
        %s199 = sand.u32 %s41, 1
        %s200 = scalar_lea.sflag [#allocation3], %s199
        %s201 = sand.u32 %s41, 1
        %s202 = smul.addr %s201, 8
        %s203 = scalar_lea.vmem [#allocation2], %s202
        // Predicated region
        $region33: #{positionwise_feed_forward.1} parent=31 // pred_check
          %p204 = pneg %p54
        $region34: #{positionwise_feed_forward.1} parent=31 // pred_check_branch
          %206 = sbr.rel (%p204) target = $region36
        $region35: #{positionwise_feed_forward.1} parent=31 // pred_region
          %207 = dma.done %s200, 128
        $region36: #{positionwise_feed_forward.1} parent=31 // pred_fallthru
          _
        // Predicated region
        $region37: #{positionwise_feed_forward.1} parent=31 // pred_check
          %p208 = pneg %p80
        $region38: #{positionwise_feed_forward.1} parent=31 // pred_check_branch
          %210 = sbr.rel (%p208) target = $region40
        $region39: #{positionwise_feed_forward.1} parent=31 // pred_region
          %211 = dma.done [#allocation6], 512
        $region40: #{positionwise_feed_forward.1} parent=31 // pred_fallthru
          _
        %s212 = sand.u32 %s41, 1
        %s213 = scalar_lea.sflag [#allocation3], %s212
        %s214 = sand.u32 %s41, 1
        %s215 = smul.addr %s214, 8
        %s216 = scalar_lea.vmem [#allocation2], %s215
        %p217 = pneg %p54
        %p218 = pneg %p51
        %p219 = pneg %p80
        %p220 = pneg %p77
        %p221 = scmp.lt.s32.totalorder %s26, 0
        %s222 = scalar_select %p221, %s26, 0
        %s223 = scalar_lea.vmem %s2, %s222
        %p224 = pneg %p106
        %p225 = pneg %p103
        %p226 = pneg %p134
        %p227 = pneg %p131
        %s228 = sand.u32 %s121, 1
        %s229 = scalar_lea.sflag [#allocation4], %s228
        %s230 = sand.u32 %s121, 1
        %s231 = smul.addr %s230, 8
        %s232 = scalar_lea.vmem [#allocation7], %s231
        %p233 = scmp.lt.s32.totalorder %s26, 0
        %s234 = scalar_select %p233, %s26, 0
        %s235 = scalar_lea.vmem %s2, %s234
        %v236 = vld [vmem:[%s203] sm:$0xff]
        %v237 = vld [vmem:[#allocation5] sm:$0xff]
        %v238 = vld [vmem:[#allocation5 + $0x8] sm:$0xff]
        %v239 = vld [vmem:[#allocation5 + $0x10] sm:$0xff]
        %v240 = vld [vmem:[#allocation5 + $0x18] sm:$0xff]
        %v241 = vld [vmem:[%s235] sm:$0x1]
        %v243 = vlaneseq
        %v244 = vshrl.u32 %v243, 7
        %v245 = vsub.s32 0, %v244
        %v246 = vrot.slane %v241, %v245
        %vm248 = vcmask 261120
        %v250 = vsel %vm248, %v236, 0
        %252 = vmatprep.subr.mxu0 0.0
        %253 = vmatpush1.msra.mxu0 %v237
        %254 = vmatprep.subr.mxu0 0.0
        %255 = vmatpush1.msra.mxu0 %v238
        %256 = vmatprep.subr.mxu0 0.0
        %257 = vmatpush1.msra.mxu0 %v239
        %258 = vmatprep.subr.mxu0 0.0
        %259 = vmatpush1.msra.mxu0 %v240
        %260 = vmatprep.subr.mxu0 0.0
        %261 = vmatpush1.msra.mxu0 0.0
        %262 = vmatprep.subr.mxu0 0.0
        %263 = vmatpush1.msra.mxu0 0.0
        %264 = vmatprep.subr.mxu0 0.0
        %265 = vmatpush1.msra.mxu0 0.0
        %266 = vmatprep.subr.mxu0 0.0
        %267 = vmatpush1.msra.mxu0 0.0
        %268 = vmatprep.subr.mxu0 0.0
        %269 = vmatpush1.msra.mxu0 0.0
        %270 = vmatprep.subr.mxu0 0.0
        %271 = vmatpush1.msra.mxu0 0.0
        %272 = vmatprep.subr.mxu0 0.0
        %273 = vmatpush1.msra.mxu0 0.0
        %274 = vmatprep.subr.mxu0 0.0
        %275 = vmatpush1.msra.mxu0 0.0
        %276 = vmatprep.subr.mxu0 0.0
        %277 = vmatpush1.msra.mxu0 0.0
        %278 = vmatprep.subr.mxu0 0.0
        %279 = vmatpush1.msra.mxu0 0.0
        %280 = vmatprep.subr.mxu0 0.0
        %281 = vmatpush1.msra.mxu0 0.0
        %282 = vmatprep.subr.mxu0 0.0
        %283 = vmatpush1.msra.mxu0 0.0
        %284 = vmatprep.subr.mxu0 0.0
        %285 = vmatpush1.msra.mxu0 0.0
        %286 = vmatprep.subr.mxu0 0.0
        %287 = vmatpush1.msra.mxu0 0.0
        %288 = vmatprep.subr.mxu0 0.0
        %289 = vmatpush1.msra.mxu0 0.0
        %290 = vmatprep.subr.mxu0 0.0
        %291 = vmatpush1.msra.mxu0 0.0
        %292 = vmatprep.subr.mxu0 0.0
        %293 = vmatpush1.msra.mxu0 0.0
        %294 = vmatprep.subr.mxu0 0.0
        %295 = vmatpush1.msra.mxu0 0.0
        %296 = vmatprep.subr.mxu0 0.0
        %297 = vmatpush1.msra.mxu0 0.0
        %298 = vmatprep.subr.mxu0 0.0
        %299 = vmatpush1.msra.mxu0 0.0
        %300 = vmatprep.subr.mxu0 0.0
        %301 = vmatpush1.msra.mxu0 0.0
        %302 = vmatprep.subr.mxu0 0.0
        %303 = vmatpush1.msra.mxu0 0.0
        %304 = vmatprep.subr.mxu0 0.0
        %305 = vmatpush1.msra.mxu0 0.0
        %306 = vmatprep.subr.mxu0 0.0
        %307 = vmatpush1.msra.mxu0 0.0
        %308 = vmatprep.subr.mxu0 0.0
        %309 = vmatpush1.msra.mxu0 0.0
        %310 = vmatprep.subr.mxu0 0.0
        %311 = vmatpush1.msra.mxu0 0.0
        %312 = vmatprep.subr.mxu0 0.0
        %313 = vmatpush1.msra.mxu0 0.0
        %314 = vmatprep.subr.mxu0 0.0
        %315 = vmatpush1.msra.mxu0 0.0
        %316 = vmatprep.mubr.f32.mxu0 0.0
        %317 = vmatmul.mubr.f32.gmra.mrb[0].mxu0 %v250
        %v318 = vpop.f32.mrb[0].mxu0
        %v319 = vadd.f32 %v246, %v318
        %v320 = vpop.f32.mrb[0].mxu0
        %321 = vdwg.mxu0
        %v322 = vmax.f32 %v319, 0.0
        %vm323 = vcmask 523264
        %324 = vst.msk [vmem:[%s232] sm:$0xff] %vm323, %v322
        %s325 = sand.u32 %s121, 1
        %s326 = scalar_lea.sflag [#allocation4], %s325
        %s327 = sand.u32 %s121, 1
        %s328 = smul.addr %s327, 8
        %s329 = scalar_lea.vmem [#allocation7], %s328
        // Predicated region
        $region41: #{positionwise_feed_forward.1} parent=31 // pred_check
          %p330 = pneg %p131
        $region42: #{positionwise_feed_forward.1} parent=31 // pred_check_branch
          %332 = sbr.rel (%p330) target = $region44
        $region43: #{positionwise_feed_forward.1} parent=31 // pred_region
          %s334 = ssub.s32 128, 128
          %335 = vsyncadd %s326, %s334
          %s336 = sadd.s32 %s26, %s25
          %s337 = smul.addr %s336, 128
          %s338 = scalar_lea.hbm %s3, %s337
          %s340 = sshll.u32 %s329, 4
          %s341 = int_to_ptr.vmem [resolvable:$true] %s340
          %343 = dma.vmem_to_hbm [thread:$0]  %s341, 128, %s338, %s326
        $region44: #{positionwise_feed_forward.1} parent=31 // pred_fallthru
          _
      $region32: #{positionwise_feed_forward.1} parent=5 // pred_fallthru
        _
      %p344 = scmp.le.s32.totalorder 2, %s16
      // Predicated region
      $region45: #{positionwise_feed_forward.1} parent=5 // pred_check
        %p345 = pneg %p344
      $region46: #{positionwise_feed_forward.1} parent=5 // pred_check_branch
        %347 = sbr.rel (%p345) target = $region48
      $region47: #{positionwise_feed_forward.1} parent=5 // pred_region
        %s348 = ssub.s32 %s16, 2
        // Predicated region
        $region49: #{positionwise_feed_forward.1} parent=47 // pred_check
          %p349 = pneg %p137
        $region50: #{positionwise_feed_forward.1} parent=47 // pred_check_branch
          %351 = sbr.rel (%p349) target = $region52
        $region51: #{positionwise_feed_forward.1} parent=47 // pred_region
          %s352 = sand.u32 %s122, 1
          %s353 = scalar_lea.sflag [#allocation4], %s352
          %s354 = sand.u32 %s122, 1
          %s355 = smul.addr %s354, 8
          %s356 = scalar_lea.vmem [#allocation7], %s355
          %357 = dma.done %s353, 128
        $region52: #{positionwise_feed_forward.1} parent=47 // pred_fallthru
          _
      $region48: #{positionwise_feed_forward.1} parent=5 // pred_fallthru
        _
    $region6: #{positionwise_feed_forward.1} parent=1 // loop_footer
      %s20 = sadd.s32 1, %s16
    $region7: #{positionwise_feed_forward.1} parent=1 // loop_footer_branch
      %15 = sbr.rel target = $region3
    $region8: #{positionwise_feed_forward.1} parent=1 // loop_exit
      _
    %358 = vsyncpa [#allocation3], 1
    %s359 = scalar_lea.sflag [#allocation3], 1
    %360 = vsyncpa %s359, 1
    %361 = vsyncpa [#allocation6], 1
    %362 = vsyncpa [#allocation4], 1
    %s363 = scalar_lea.sflag [#allocation4], 1
    %364 = vsyncpa %s363, 1

</llo_original>
